<compile_context>
chip_gen: v7x
topology: tpu7x:2x2x1
jax: 0.10.0
libtpu: 0.0.40
codegen_flags: <defaults>
</compile_context>

<pallas_src>
import functools

import jax
import jax.numpy as jnp
from jax.experimental import pallas as pl
from jax.experimental.pallas import tpu as pltpu

LANES = 128
DEFAULT_ROW_TILE = 2048  # (2048,128) f32 block = 1 MiB; 2 bufs x (in+out) = 4 MiB VMEM


def _mish_kernel(x_ref, o_ref):
    x = x_ref[...].astype(jnp.float32)
    # tanh(softplus(x)) with a single exp:
    #   e = exp(x);  tanh(log1p(e)) = e*(e+2) / (e*(e+2) + 2)
    # The min(x, 20) clamp mirrors torch softplus's threshold=20: for x > 20
    # the ratio is exactly 1.0 at f32 precision (matching softplus(x)=x and
    # tanh(x)~=1 there) and it also prevents exp overflow.
    e = jnp.exp(jnp.minimum(x, 20.0))
    t = e * (e + 2.0)
    y = x * (t / (t + 2.0))
    o_ref[...] = y.astype(o_ref.dtype)


def _round_up(a, b):
    return (a + b - 1) // b * b


def _min_sublanes(dtype):
    # Minimum sublane tile: 8 for 4-byte, 16 for 2-byte, 32 for 1-byte dtypes.
    itemsize = jnp.dtype(dtype).itemsize
    return 8 * max(1, 4 // itemsize)


@functools.partial(jax.jit, static_argnames=("row_tile",))
def mish(x, *, row_tile=None):
    """Elementwise Mish for any shape; flattens to a lane-dense (rows, 128) slab."""
    orig_shape = x.shape
    orig_dtype = x.dtype
    n = x.size
    if n == 0:
        return x

    min_sub = _min_sublanes(orig_dtype)
    chunk = min_sub * LANES  # pad unit keeps `rows` sublane-aligned

    # Flatten; this reshape is a free bitcast when n is already chunk-aligned
    # (the common case for conv activations) so no extra HBM pass is paid.
    flat = x.reshape(-1)
    n_pad = _round_up(n, chunk)
    padded = n_pad != n
    if padded:
        # TODO(synk): a tail-only pad kernel would avoid this whole-array copy;
        # it only triggers when n is not a multiple of min_sub*128 elements.
        flat = jnp.pad(flat, (0, n_pad - n))
    rows = n_pad // LANES
    x2d = flat.reshape(rows, LANES)

    if row_tile is None:
        row_tile = DEFAULT_ROW_TILE
    # Never exceed the array (block == full dim for small inputs) and keep the
    # sublane count a multiple of the dtype's minimum tile.
    row_tile = _round_up(min(row_tile, rows), min_sub)

    grid = (pl.cdiv(rows, row_tile),)  # partial last block handled by Pallas

    itemsize = jnp.dtype(orig_dtype).itemsize
    out2d = pl.pallas_call(
        _mish_kernel,
        out_shape=jax.ShapeDtypeStruct((rows, LANES), orig_dtype),
        grid_spec=pltpu.PrefetchScalarGridSpec(
            num_scalar_prefetch=0,
            grid=grid,
            in_specs=[pl.BlockSpec((row_tile, LANES), lambda i: (i, 0))],
            out_specs=pl.BlockSpec((row_tile, LANES), lambda i: (i, 0)),
        ),
        compiler_params=pltpu.CompilerParams(
            dimension_semantics=("parallel",),
        ),
        cost_estimate=pl.CostEstimate(
            flops=5 * n,
            transcendentals=2 * n,  # 1 exp + 1 divide per element
            bytes_accessed=2 * n * itemsize,
        ),
    )(x2d)

    if padded:
        return out2d.reshape(-1)[:n].reshape(orig_shape)
    return out2d.reshape(orig_shape)


def mish_ref(x):
    # Direct translation of x * tanh(F.softplus(x)) with torch's threshold=20.
    xf = x.astype(jnp.float32)
    sp = jnp.where(xf > 20.0, xf, jnp.log1p(jnp.exp(jnp.minimum(xf, 20.0))))
    return (xf * jnp.tanh(sp)).astype(x.dtype)


if __name__ == "__main__":
    key = jax.random.PRNGKey(0)
    # NCHW input consistent with the conv-net context the module lives in.
    x = jax.random.normal(key, (2, 4, 16, 16), dtype=jnp.float32) * 3.0

    y = jax.block_until_ready(mish(x))
    y_ref = mish_ref(x)
    assert y.shape == x.shape and y.dtype == x.dtype
    assert jnp.allclose(y, y_ref, atol=1e-5, rtol=1e-5)

    # bf16 path exercises the 16-row minimum sublane tile.
    xb = x.astype(jnp.bfloat16)
    yb = jax.block_until_ready(mish(xb))
    assert yb.shape == xb.shape and yb.dtype == jnp.bfloat16
    assert jnp.allclose(yb.astype(jnp.float32), mish_ref(xb).astype(jnp.float32),
                        atol=2e-2, rtol=2e-2)

    # Non-multiple-of-128 size exercises the (tiny) tail-pad path.
    xo = jax.random.normal(jax.random.PRNGKey(1), (3, 5, 7), dtype=jnp.float32) * 3.0
    yo = jax.block_until_ready(mish(xo))
    assert jnp.allclose(yo, mish_ref(xo), atol=1e-5, rtol=1e-5)

    print("KERNEL_OK")
</pallas_src>

<mosaic_0001>
module attributes {stable_mosaic.version = 11 : i64} {
  func.func @_mish_kernel(%arg0: i32, %arg1: memref<16x128xf32, #tpu.memory_space<vmem>>, %arg2: memref<16x128xf32, #tpu.memory_space<vmem>>) attributes {dimension_semantics = [#tpu.dimension_semantics<parallel>], iteration_bounds = array<i64: 1>, scalar_prefetch = 0 : i64, scratch_operands = 0 : i64, tpu.core_type = #tpu.core_type<tc>, window_params = [{transform_indices = @transform_0, window_bounds = array<i64: 16, 128>}, {transform_indices = @transform_1, window_bounds = array<i64: 16, 128>}]} {
    %c0 = arith.constant 0 : index
    %c0_0 = arith.constant 0 : index
    %0 = vector.load %arg1[%c0, %c0_0] : memref<16x128xf32, #tpu.memory_space<vmem>>, vector<16x128xf32>
    %cst = arith.constant 2.000000e+01 : f32
    %1 = vector.broadcast %cst : f32 to vector<16x128xf32>
    %2 = arith.minimumf %0, %1 : vector<16x128xf32>
    %3 = math.exp %2 : vector<16x128xf32>
    %cst_1 = arith.constant 2.000000e+00 : f32
    %4 = vector.broadcast %cst_1 : f32 to vector<16x128xf32>
    %5 = arith.addf %3, %4 : vector<16x128xf32>
    %6 = arith.mulf %3, %5 : vector<16x128xf32>
    %cst_2 = arith.constant 2.000000e+00 : f32
    %7 = vector.broadcast %cst_2 : f32 to vector<16x128xf32>
    %8 = arith.addf %6, %7 : vector<16x128xf32>
    %9 = arith.divf %6, %8 : vector<16x128xf32>
    %10 = arith.mulf %0, %9 : vector<16x128xf32>
    %c0_3 = arith.constant 0 : index
    %c0_4 = arith.constant 0 : index
    %11 = vector.load %arg2[%c0_3, %c0_4] : memref<16x128xf32, #tpu.memory_space<vmem>>, vector<16x128xf32>
    tpu.vector_store %arg2[%c0_3, %c0_4], %10 {strides = array<i32>} : memref<16x128xf32, #tpu.memory_space<vmem>>, vector<16x128xf32>,
    return
  }
  func.func @transform_0(%arg0: i32) -> (i32, i32) {
    %c0_i32 = arith.constant 0 : i32
    %c0_i32_0 = arith.constant 0 : i32
    return %arg0, %c0_i32 : i32, i32
  }
  func.func @transform_1(%arg0: i32) -> (i32, i32) {
    %c0_i32 = arith.constant 0 : i32
    %c0_i32_0 = arith.constant 0 : i32
    return %arg0, %c0_i32 : i32, i32
  }
}

</mosaic_0001>

<llo_original>
// kernel: mish.1
$region0: #{mish.1}
  #allocation0 [shape = 'u32[]', space=smem, size = 0x4, offset = 0x4, fixed_abs, tag = 'smem constant byte address 0x4 - core index']
  #allocation1 [shape = 'u32[144,128]{1,0:T(1,128)}', space=vmem, size = 0x12000, scoped, tag = 'internal scratch']
  %s0 = inlined_call_operand.vmem [shape: f32[16,128], index: 0, kind: input, shape index: {}]
  %s1 = inlined_call_operand.vmem [shape: f32[16,128], index: 1, kind: output, shape index: {}]
  %s2 = sld [smem:[#allocation0]]
  $region14: #{mish.1} parent=0
    _
  %s4 = ssub.s32 1, %s2
  %s5 = scalar_select 0, %s4, %s2
  // Predicated region
  $region2: #{mish.1} parent=0 // pred_check
    _
  $region3: #{mish.1} parent=0 // pred_check_branch
    %7 = sbr.rel (0) target = $region5
  $region4: #{mish.1} parent=0 // pred_region
    _
  $region5: #{mish.1} parent=0 // pred_fallthru
    _
  %v8 = vld [vmem:[%s0] sm:$0xff]
  %v9 = vld [vmem:[%s0 + $0x8] sm:$0xff]
  %v10 = vmin.f32 %v8, 20.0
  %v11 = vmin.f32 %v9, 20.0
  %v12 = vmul.f32 %v10, 1.442695
  %v13 = vpow.pop %v12
  %v14 = vmul.f32 %v11, 1.442695
  %v15 = vpow.pop %v14
  %v16 = vadd.f32 %v13, 2.0
  %v17 = vadd.f32 %v15, 2.0
  %v18 = vmul.f32 %v13, %v16
  %v19 = vmul.f32 %v15, %v17
  %v20 = vadd.f32 %v18, 2.0
  %v21 = vadd.f32 %v19, 2.0
  %v22 = vrcp.pop %v20
  %v23 = vmul.f32 %v18, %v22
  %v24 = vrcp.pop %v21
  %v25 = vmul.f32 %v19, %v24
  %v26 = vmul.f32 %v8, %v23
  %v27 = vmul.f32 %v9, %v25
  %28 = vst [vmem:[%s1] sm:$0xff] %v26
  %29 = vst [vmem:[%s1 + $0x8] sm:$0xff] %v27
  // Predicated region
  $region6: #{mish.1} parent=0 // pred_check
    _
  $region7: #{mish.1} parent=0 // pred_check_branch
    %31 = sbr.rel (0) target = $region9
  $region8: #{mish.1} parent=0 // pred_region
    _
  $region9: #{mish.1} parent=0 // pred_fallthru
    _
  // Predicated region
  $region10: #{mish.1} parent=0 // pred_check
    _
  $region11: #{mish.1} parent=0 // pred_check_branch
    %33 = sbr.rel (0) target = $region13
  $region12: #{mish.1} parent=0 // pred_region
    _
  $region13: #{mish.1} parent=0 // pred_fallthru
    _

</llo_original>
